<compile_context>
chip_gen: v6e
topology: v6e:2x2x1
jax: 0.10.0
libtpu: 0.0.40
codegen_flags: <defaults>
</compile_context>

<pallas_src>
import functools

import jax
import jax.numpy as jnp
from jax import lax
from jax.experimental import pallas as pl
from jax.experimental.pallas import tpu as pltpu

LANES = 128
CHUNK_ROWS = 256      # 256 rows x 128 lanes: 128 KiB f32 / 64 KiB bf16 per inner chunk


def _round_up(x, m):
    return ((x + m - 1) // m) * m


def _target_tile_bytes():
    """Per-generation HBM-streaming block size (bytes) for the pipelined input."""
    try:
        kind = jax.devices()[0].device_kind.lower()
    except Exception:
        return 4 << 20
    if "v5 lite" in kind or "v5e" in kind or "v5lite" in kind:
        return 2 << 20   # v5e: 16 MiB scoped-VMEM default -> 2 MiB tile, 4 MiB double-buffered
    if "v7" in kind or "7x" in kind:
        return 8 << 20   # v7x: ~3.2 TB/s per TC -> 8 MiB tile, 16 MiB double-buffered (< 32 MiB)
    return 4 << 20       # v6e / unknown: 4 MiB tile, 8 MiB double-buffered (< 32 MiB)


def _elastic_net_kernel(x_ref, l1_ref, sq_ref, *, chunk, n_chunks, valid_rows_last):
    """Streams (row_tile, 128) blocks; accumulates sum|x| and sum(x*x) into the
    resident (8, 128) f32 output accumulators with VALU-only per-chunk adds."""
    t = pl.program_id(0)
    nt = pl.num_programs(0)
    row_tile = chunk * n_chunks

    @pl.when(t == 0)
    def _init():
        l1_ref[...] = jnp.zeros_like(l1_ref)
        sq_ref[...] = jnp.zeros_like(sq_ref)

    def reduce_tile(valid_rows):
        # valid_rows: None -> all rows of this block are valid (fast, unmasked path);
        #             int  -> only the first `valid_rows` rows are valid (last block,
        #                     the rest of the VMEM buffer is unspecified padding).
        if valid_rows is None:
            n_loop = n_chunks
            row_iota = None
        else:
            n_loop = pl.cdiv(valid_rows, chunk)
            row_iota = lax.broadcasted_iota(jnp.int32, (chunk, LANES), 0)

        def step(c, carry):
            off = pl.multiple_of(c * chunk, chunk)
            x = x_ref[pl.ds(off, chunk), :].astype(jnp.float32)
            if valid_rows is not None:
                # Zero out rows past the end of the array before abs/square.
                x = jnp.where(row_iota < (valid_rows - c * chunk), x, 0.0)
            x3 = x.reshape(chunk // 8, 8, LANES)
            l1_ref[...] += jnp.sum(jnp.abs(x3), axis=0)
            sq_ref[...] += jnp.sum(x3 * x3, axis=0)
            return carry

        lax.fori_loop(0, n_loop, step, 0, unroll=min(8, n_loop))

    if valid_rows_last == row_tile:
        # Rows divide the tile exactly: one unmasked hot path for every step.
        reduce_tile(None)
    else:
        @pl.when(t < nt - 1)
        def _full_tiles():
            reduce_tile(None)

        @pl.when(t == nt - 1)
        def _partial_tile():
            reduce_tile(valid_rows_last)


def _sum_abs_and_sq(x2d, tile_bytes):
    """Pallas streaming reduction over x2d of shape (rows, 128).

    Returns (sum|x|, sum x^2) as f32 scalars."""
    rows = x2d.shape[0]
    itemsize = x2d.dtype.itemsize

    # Byte-based tile sizing, rounded to the chunk granularity; clamp for small inputs.
    row_tile = max(CHUNK_ROWS,
                   (tile_bytes // (LANES * itemsize)) // CHUNK_ROWS * CHUNK_ROWS)
    row_tile = min(row_tile, _round_up(rows, CHUNK_ROWS))
    n_tiles = pl.cdiv(rows, row_tile)
    valid_rows_last = rows - (n_tiles - 1) * row_tile   # static, in (0, row_tile]
    n_chunks = row_tile // CHUNK_ROWS

    kernel = functools.partial(
        _elastic_net_kernel,
        chunk=CHUNK_ROWS, n_chunks=n_chunks, valid_rows_last=valid_rows_last)

    acc_spec = pl.BlockSpec((8, LANES), lambda t: (0, 0))   # resident accumulator
    l1_tiles, sq_tiles = pl.pallas_call(
        kernel,
        out_shape=(jax.ShapeDtypeStruct((8, LANES), jnp.float32),
                   jax.ShapeDtypeStruct((8, LANES), jnp.float32)),
        grid_spec=pltpu.PrefetchScalarGridSpec(
            num_scalar_prefetch=0,
            grid=(n_tiles,),
            in_specs=[pl.BlockSpec((row_tile, LANES), lambda t: (t, 0))],
            out_specs=(acc_spec, acc_spec),
        ),
        compiler_params=pltpu.CompilerParams(
            dimension_semantics=("arbitrary",),   # sequential reduction axis
        ),
    )(x2d)
    # Tiny (8,128) -> scalar reduces happen here (4 KiB each), not in the hot loop.
    return jnp.sum(l1_tiles), jnp.sum(sq_tiles)


@functools.partial(jax.jit, static_argnames=("tile_bytes",))
def _penalty_impl(parameters, alpha, l1_ratio, tile_bytes):
    flat = parameters.reshape(-1)          # contiguous reshape: no HBM copy
    n = flat.shape[0]
    rem = n % LANES                        # < 128 ragged remainder (usually 0)
    n_main = n - rem

    if n_main > 0:
        main = flat if rem == 0 else flat[:n_main]   # slice only in the rare ragged case
        x2d = main.reshape(n_main // LANES, LANES)
        l1, sq = _sum_abs_and_sq(x2d, tile_bytes)
    else:
        l1 = jnp.float32(0.0)
        sq = jnp.float32(0.0)

    if rem > 0:
        tail = flat[n_main:].astype(jnp.float32)     # <= 127 elements, plain JAX
        l1 = l1 + jnp.sum(jnp.abs(tail))
        sq = sq + jnp.sum(tail * tail)

    l2 = jnp.sqrt(sq)
    return alpha * (l1_ratio * l1 + (1.0 - l1_ratio) * l2)


def elastic_net_penalty(parameters, alpha=1.0, l1_ratio=0.5, tile_bytes=None):
    """Pallas implementation of ElasticNetPenalty.forward.

    parameters: any-shape float array (e.g. NCHW conv weights).
    Returns a scalar f32: alpha * (l1_ratio * ||p||_1 + (1 - l1_ratio) * ||p||_2)
    """
    if parameters.dtype.itemsize >= 8:     # f64 is not supported by Mosaic; cast up front
        parameters = parameters.astype(jnp.float32)
    if tile_bytes is None:
        tile_bytes = _target_tile_bytes()
    return _penalty_impl(parameters, jnp.float32(alpha), jnp.float32(l1_ratio),
                         int(tile_bytes))


class ElasticNetPenalty:
    """Drop-in functional equivalent of the PyTorch module."""

    def __init__(self, alpha=1.0, l1_ratio=0.5):
        self.alpha = alpha
        self.l1_ratio = l1_ratio

    def __call__(self, parameters):
        return elastic_net_penalty(parameters, self.alpha, self.l1_ratio)


def _reference(params, alpha, l1_ratio):
    p = params.astype(jnp.float32)
    l1 = jnp.sum(jnp.abs(p))
    l2 = jnp.sqrt(jnp.sum(p * p))
    return alpha * (l1_ratio * l1 + (1.0 - l1_ratio) * l2)


if __name__ == "__main__":
    key = jax.random.PRNGKey(0)
    k1, k2, k3, k4 = jax.random.split(key, 4)

    # 1) Small NCHW parameter tensor (single partial-tile / masked path).
    p1 = jax.random.normal(k1, (2, 4, 16, 16), dtype=jnp.float32)
    out1 = jax.block_until_ready(elastic_net_penalty(p1, alpha=1.0, l1_ratio=0.5))
    ref1 = _reference(p1, 1.0, 0.5)
    assert jnp.allclose(out1, ref1, rtol=1e-4, atol=1e-2), (out1, ref1)

    # 2) Multi-tile grid + partial last tile (small tile_bytes to exercise the grid).
    p2 = jax.random.normal(k2, (4, 8, 64, 65), dtype=jnp.float32)   # 133120 elems = 1040 rows
    out2 = jax.block_until_ready(
        elastic_net_penalty(p2, alpha=0.3, l1_ratio=0.7, tile_bytes=256 * 1024))
    ref2 = _reference(p2, 0.3, 0.7)
    assert jnp.allclose(out2, ref2, rtol=1e-4, atol=1e-2), (out2, ref2)

    # 3) Element count not divisible by 128 (tiny plain-JAX tail path).
    p3 = jax.random.normal(k3, (3, 5, 7, 11), dtype=jnp.float32)    # 1155 elements
    out3 = jax.block_until_ready(elastic_net_penalty(p3, alpha=0.5, l1_ratio=0.25))
    ref3 = _reference(p3, 0.5, 0.25)
    assert jnp.allclose(out3, ref3, rtol=1e-4, atol=1e-2), (out3, ref3)

    # 4) bf16 parameters (per-tile in-VMEM cast path).
    p4 = jax.random.normal(k4, (2, 4, 16, 16), dtype=jnp.bfloat16)
    out4 = jax.block_until_ready(ElasticNetPenalty(1.0, 0.5)(p4))
    ref4 = _reference(p4, 1.0, 0.5)
    assert jnp.allclose(out4, ref4, rtol=1e-2, atol=1e-1), (out4, ref4)

    print("KERNEL_OK")
</pallas_src>

<mosaic_0001>
module attributes {stable_mosaic.version = 11 : i64} {
  func.func @_elastic_net_kernel(%arg0: i32, %arg1: memref<256x128xf32, #tpu.memory_space<vmem>>, %arg2: memref<8x128xf32, #tpu.memory_space<vmem>>, %arg3: memref<8x128xf32, #tpu.memory_space<vmem>>) attributes {dimension_semantics = [#tpu.dimension_semantics<arbitrary>], iteration_bounds = array<i64: 1>, scalar_prefetch = 0 : i64, scratch_operands = 0 : i64, tpu.core_type = #tpu.core_type<tc>, window_params = [{transform_indices = @transform_0, window_bounds = array<i64: 256, 128>}, {pipeline_mode = #tpu.pipeline_mode<synchronous>, transform_indices = @transform_1, window_bounds = array<i64: 8, 128>}, {pipeline_mode = #tpu.pipeline_mode<synchronous>, transform_indices = @transform_2, window_bounds = array<i64: 8, 128>}]} {
    %c0_i32 = arith.constant 0 : i32
    %0 = arith.cmpi eq, %arg0, %c0_i32 : i32
    %1 = arith.extui %0 : i1 to i32
    %c0_i32_0 = arith.constant 0 : i32
    %2 = arith.cmpi ne, %1, %c0_i32_0 : i32
    scf.if %2 {
      %cst = arith.constant 0.000000e+00 : f32
      %9 = vector.broadcast %cst : f32 to vector<8x128xf32>
      %c0 = arith.constant 0 : index
      %c0_5 = arith.constant 0 : index
      %10 = vector.load %arg2[%c0, %c0_5] : memref<8x128xf32, #tpu.memory_space<vmem>>, vector<8x128xf32>
      tpu.vector_store %arg2[%c0, %c0_5], %9 {strides = array<i32>} : memref<8x128xf32, #tpu.memory_space<vmem>>, vector<8x128xf32>,
      %cst_6 = arith.constant 0.000000e+00 : f32
      %11 = vector.broadcast %cst_6 : f32 to vector<8x128xf32>
      %c0_7 = arith.constant 0 : index
      %c0_8 = arith.constant 0 : index
      %12 = vector.load %arg3[%c0_7, %c0_8] : memref<8x128xf32, #tpu.memory_space<vmem>>, vector<8x128xf32>
      tpu.vector_store %arg3[%c0_7, %c0_8], %11 {strides = array<i32>} : memref<8x128xf32, #tpu.memory_space<vmem>>, vector<8x128xf32>,
    } else {
    }
    %c0_i32_1 = arith.constant 0 : i32
    %3 = arith.cmpi slt, %arg0, %c0_i32_1 : i32
    %4 = arith.extui %3 : i1 to i32
    %c0_i32_2 = arith.constant 0 : i32
    %5 = arith.cmpi ne, %4, %c0_i32_2 : i32
    scf.if %5 {
      %c0_i32_5 = arith.constant 0 : i32
      %c256_i32 = arith.constant 256 : i32
      %9 = arith.muli %c0_i32_5, %c256_i32 : i32
      %10 = tpu.assume_multiple %9, 256 : i32
      %11 = arith.index_cast %10 : i32 to index
      %c0 = arith.constant 0 : index
      %12 = vector.load %arg1[%11, %c0] : memref<256x128xf32, #tpu.memory_space<vmem>>, vector<256x128xf32>
      %13 = vector.shape_cast %12 : vector<256x128xf32> to vector<32x8x128xf32>
      %c0_6 = arith.constant 0 : index
      %c0_7 = arith.constant 0 : index
      %14 = vector.load %arg2[%c0_6, %c0_7] : memref<8x128xf32, #tpu.memory_space<vmem>>, vector<8x128xf32>
      %15 = math.absf %13 : vector<32x8x128xf32>
      %cst = arith.constant dense<0.000000e+00> : vector<8x128xf32>
      %16 = vector.multi_reduction <add>, %15, %cst [0] : vector<32x8x128xf32> to vector<8x128xf32>
      %17 = arith.addf %14, %16 : vector<8x128xf32>
      %c0_8 = arith.constant 0 : index
      %c0_9 = arith.constant 0 : index
      %18 = vector.load %arg2[%c0_8, %c0_9] : memref<8x128xf32, #tpu.memory_space<vmem>>, vector<8x128xf32>
      tpu.vector_store %arg2[%c0_8, %c0_9], %17 {strides = array<i32>} : memref<8x128xf32, #tpu.memory_space<vmem>>, vector<8x128xf32>,
      %c0_10 = arith.constant 0 : index
      %c0_11 = arith.constant 0 : index
      %19 = vector.load %arg3[%c0_10, %c0_11] : memref<8x128xf32, #tpu.memory_space<vmem>>, vector<8x128xf32>
      %20 = arith.mulf %13, %13 : vector<32x8x128xf32>
      %cst_12 = arith.constant dense<0.000000e+00> : vector<8x128xf32>
      %21 = vector.multi_reduction <add>, %20, %cst_12 [0] : vector<32x8x128xf32> to vector<8x128xf32>
      %22 = arith.addf %19, %21 : vector<8x128xf32>
      %c0_13 = arith.constant 0 : index
      %c0_14 = arith.constant 0 : index
      %23 = vector.load %arg3[%c0_13, %c0_14] : memref<8x128xf32, #tpu.memory_space<vmem>>, vector<8x128xf32>
      tpu.vector_store %arg3[%c0_13, %c0_14], %22 {strides = array<i32>} : memref<8x128xf32, #tpu.memory_space<vmem>>, vector<8x128xf32>,
      %c1_i32 = arith.constant 1 : i32
    } else {
    }
    %c0_i32_3 = arith.constant 0 : i32
    %6 = arith.cmpi eq, %arg0, %c0_i32_3 : i32
    %7 = arith.extui %6 : i1 to i32
    %c0_i32_4 = arith.constant 0 : i32
    %8 = arith.cmpi ne, %7, %c0_i32_4 : i32
    scf.if %8 {
      %9 = tpu.iota {dimensions = array<i32: 0>} : vector<256x128xi32>
      %c0_i32_5 = arith.constant 0 : i32
      %c256_i32 = arith.constant 256 : i32
      %10 = arith.muli %c0_i32_5, %c256_i32 : i32
      %11 = tpu.assume_multiple %10, 256 : i32
      %12 = arith.index_cast %11 : i32 to index
      %c0 = arith.constant 0 : index
      %13 = vector.load %arg1[%12, %c0] : memref<256x128xf32, #tpu.memory_space<vmem>>, vector<256x128xf32>
      %c256_i32_6 = arith.constant 256 : i32
      %14 = arith.muli %c0_i32_5, %c256_i32_6 : i32
      %c16_i32 = arith.constant 16 : i32
      %15 = arith.subi %c16_i32, %14 : i32
      %16 = vector.broadcast %15 : i32 to vector<256x128xi32>
      %17 = arith.cmpi slt, %9, %16 : vector<256x128xi32>
      %cst = arith.constant 0.000000e+00 : f32
      %18 = vector.broadcast %cst : f32 to vector<256x128xf32>
      %19 = arith.select %17, %13, %18 : vector<256x128xi1>, vector<256x128xf32>
      %20 = vector.shape_cast %19 : vector<256x128xf32> to vector<32x8x128xf32>
      %c0_7 = arith.constant 0 : index
      %c0_8 = arith.constant 0 : index
      %21 = vector.load %arg2[%c0_7, %c0_8] : memref<8x128xf32, #tpu.memory_space<vmem>>, vector<8x128xf32>
      %22 = math.absf %20 : vector<32x8x128xf32>
      %cst_9 = arith.constant dense<0.000000e+00> : vector<8x128xf32>
      %23 = vector.multi_reduction <add>, %22, %cst_9 [0] : vector<32x8x128xf32> to vector<8x128xf32>
      %24 = arith.addf %21, %23 : vector<8x128xf32>
      %c0_10 = arith.constant 0 : index
      %c0_11 = arith.constant 0 : index
      %25 = vector.load %arg2[%c0_10, %c0_11] : memref<8x128xf32, #tpu.memory_space<vmem>>, vector<8x128xf32>
      tpu.vector_store %arg2[%c0_10, %c0_11], %24 {strides = array<i32>} : memref<8x128xf32, #tpu.memory_space<vmem>>, vector<8x128xf32>,
      %c0_12 = arith.constant 0 : index
      %c0_13 = arith.constant 0 : index
      %26 = vector.load %arg3[%c0_12, %c0_13] : memref<8x128xf32, #tpu.memory_space<vmem>>, vector<8x128xf32>
      %27 = arith.mulf %20, %20 : vector<32x8x128xf32>
      %cst_14 = arith.constant dense<0.000000e+00> : vector<8x128xf32>
      %28 = vector.multi_reduction <add>, %27, %cst_14 [0] : vector<32x8x128xf32> to vector<8x128xf32>
      %29 = arith.addf %26, %28 : vector<8x128xf32>
      %c0_15 = arith.constant 0 : index
      %c0_16 = arith.constant 0 : index
      %30 = vector.load %arg3[%c0_15, %c0_16] : memref<8x128xf32, #tpu.memory_space<vmem>>, vector<8x128xf32>
      tpu.vector_store %arg3[%c0_15, %c0_16], %29 {strides = array<i32>} : memref<8x128xf32, #tpu.memory_space<vmem>>, vector<8x128xf32>,
      %c1_i32 = arith.constant 1 : i32
    } else {
    }
    return
  }
  func.func @transform_0(%arg0: i32) -> (i32, i32) {
    %c0_i32 = arith.constant 0 : i32
    %c0_i32_0 = arith.constant 0 : i32
    return %arg0, %c0_i32 : i32, i32
  }
  func.func @transform_1(%arg0: i32) -> (i32, i32) {
    %c0_i32 = arith.constant 0 : i32
    %c0_i32_0 = arith.constant 0 : i32
    %c0_i32_1 = arith.constant 0 : i32
    return %c0_i32, %c0_i32_0 : i32, i32
  }
  func.func @transform_2(%arg0: i32) -> (i32, i32) {
    %c0_i32 = arith.constant 0 : i32
    %c0_i32_0 = arith.constant 0 : i32
    %c0_i32_1 = arith.constant 0 : i32
    return %c0_i32, %c0_i32_0 : i32, i32
  }
}

</mosaic_0001>

<llo_original>
// kernel: _penalty_impl.1
$region0: #{_penalty_impl.1}
  #allocation0 [shape = 'u32[]', space=smem, size = 0x4, offset = 0x4, fixed_abs, tag = 'smem constant byte address 0x4 - core index']
  #allocation1 [shape = 'u32[144,128]{1,0:T(1,128)}', space=vmem, size = 0x12000, scoped, tag = 'internal scratch']
  %s0 = inlined_call_operand.vmem [shape: f32[16,128], index: 0, kind: input, shape index: {}]
  %s1 = inlined_call_operand.vmem [shape: f32[8,128], index: 1, kind: output, shape index: {0}]
  %s2 = inlined_call_operand.vmem [shape: f32[8,128], index: 2, kind: output, shape index: {1}]
  %3 = xla_tuple %s1, %s2
  %s4 = sld [smem:[#allocation0]]
  $region34: #{_penalty_impl.1} parent=0
    _
  %s6 = ssub.s32 1, %s4
  %s7 = scalar_select 0, %s6, %s4
  // Predicated region
  $region2: #{_penalty_impl.1} parent=0 // pred_check
    _
  $region3: #{_penalty_impl.1} parent=0 // pred_check_branch
    %9 = sbr.rel (0) target = $region5
  $region4: #{_penalty_impl.1} parent=0 // pred_region
    _
  $region5: #{_penalty_impl.1} parent=0 // pred_fallthru
    _
  %p10 = scmp.eq.s32.totalorder 0, 0
  // Predicated region
  $region6: #{_penalty_impl.1} parent=0 // pred_check
    %p11 = pneg %p10
  $region7: #{_penalty_impl.1} parent=0 // pred_check_branch
    %13 = sbr.rel (%p11) target = $region9
  $region8: #{_penalty_impl.1} parent=0 // pred_region
    %14 = vst [vmem:[%s1] sm:$0xff] 0.0
    %15 = vst [vmem:[%s2] sm:$0xff] 0.0
  $region9: #{_penalty_impl.1} parent=0 // pred_fallthru
    _
  %p16 = scmp.lt.s32.totalorder 0, 0
  // Predicated region
  $region10: #{_penalty_impl.1} parent=0 // pred_check
    %p17 = pneg %p16
  $region11: #{_penalty_impl.1} parent=0 // pred_check_branch
    %19 = sbr.rel (%p17) target = $region13
  $region12: #{_penalty_impl.1} parent=0 // pred_region
    %v20 = vld [vmem:[%s0] sm:$0xff]
    %v21 = vld [vmem:[%s0 + $0x8] sm:$0xff]
    %v22 = vld [vmem:[%s0 + $0x10] sm:$0xff]
    %v23 = vld [vmem:[%s0 + $0x18] sm:$0xff]
    %v24 = vld [vmem:[%s0 + $0x20] sm:$0xff]
    %v25 = vld [vmem:[%s0 + $0x28] sm:$0xff]
    %v26 = vld [vmem:[%s0 + $0x30] sm:$0xff]
    %v27 = vld [vmem:[%s0 + $0x38] sm:$0xff]
    %v28 = vld [vmem:[%s0 + $0x40] sm:$0xff]
    %v29 = vld [vmem:[%s0 + $0x48] sm:$0xff]
    %v30 = vld [vmem:[%s0 + $0x50] sm:$0xff]
    %v31 = vld [vmem:[%s0 + $0x58] sm:$0xff]
    %v32 = vld [vmem:[%s0 + $0x60] sm:$0xff]
    %v33 = vld [vmem:[%s0 + $0x68] sm:$0xff]
    %v34 = vld [vmem:[%s0 + $0x70] sm:$0xff]
    %v35 = vld [vmem:[%s0 + $0x78] sm:$0xff]
    %v36 = vld [vmem:[%s0 + $0x80] sm:$0xff]
    %v37 = vld [vmem:[%s0 + $0x88] sm:$0xff]
    %v38 = vld [vmem:[%s0 + $0x90] sm:$0xff]
    %v39 = vld [vmem:[%s0 + $0x98] sm:$0xff]
    %v40 = vld [vmem:[%s0 + $0xa0] sm:$0xff]
    %v41 = vld [vmem:[%s0 + $0xa8] sm:$0xff]
    %v42 = vld [vmem:[%s0 + $0xb0] sm:$0xff]
    %v43 = vld [vmem:[%s0 + $0xb8] sm:$0xff]
    %v44 = vld [vmem:[%s0 + $0xc0] sm:$0xff]
    %v45 = vld [vmem:[%s0 + $0xc8] sm:$0xff]
    %v46 = vld [vmem:[%s0 + $0xd0] sm:$0xff]
    %v47 = vld [vmem:[%s0 + $0xd8] sm:$0xff]
    %v48 = vld [vmem:[%s0 + $0xe0] sm:$0xff]
    %v49 = vld [vmem:[%s0 + $0xe8] sm:$0xff]
    %v50 = vld [vmem:[%s0 + $0xf0] sm:$0xff]
    %v51 = vld [vmem:[%s0 + $0xf8] sm:$0xff]
    %v52 = vld [vmem:[%s1] sm:$0xff]
    %v53 = vand.u32 2147483647, %v20
    %v54 = vand.u32 2147483647, %v21
    %v55 = vand.u32 2147483647, %v22
    %v56 = vand.u32 2147483647, %v23
    %v57 = vand.u32 2147483647, %v24
    %v58 = vand.u32 2147483647, %v25
    %v59 = vand.u32 2147483647, %v26
    %v60 = vand.u32 2147483647, %v27
    %v61 = vand.u32 2147483647, %v28
    %v62 = vand.u32 2147483647, %v29
    %v63 = vand.u32 2147483647, %v30
    %v64 = vand.u32 2147483647, %v31
    %v65 = vand.u32 2147483647, %v32
    %v66 = vand.u32 2147483647, %v33
    %v67 = vand.u32 2147483647, %v34
    %v68 = vand.u32 2147483647, %v35
    %v69 = vand.u32 2147483647, %v36
    %v70 = vand.u32 2147483647, %v37
    %v71 = vand.u32 2147483647, %v38
    %v72 = vand.u32 2147483647, %v39
    %v73 = vand.u32 2147483647, %v40
    %v74 = vand.u32 2147483647, %v41
    %v75 = vand.u32 2147483647, %v42
    %v76 = vand.u32 2147483647, %v43
    %v77 = vand.u32 2147483647, %v44
    %v78 = vand.u32 2147483647, %v45
    %v79 = vand.u32 2147483647, %v46
    %v80 = vand.u32 2147483647, %v47
    %v81 = vand.u32 2147483647, %v48
    %v82 = vand.u32 2147483647, %v49
    %v83 = vand.u32 2147483647, %v50
    %v84 = vand.u32 2147483647, %v51
    %v85 = vadd.f32 %v53, %v54
    %v86 = vadd.f32 %v85, %v55
    %v87 = vadd.f32 %v86, %v56
    %v88 = vadd.f32 %v87, %v57
    %v89 = vadd.f32 %v88, %v58
    %v90 = vadd.f32 %v89, %v59
    %v91 = vadd.f32 %v90, %v60
    %v92 = vadd.f32 %v91, %v61
    %v93 = vadd.f32 %v92, %v62
    %v94 = vadd.f32 %v93, %v63
    %v95 = vadd.f32 %v94, %v64
    %v96 = vadd.f32 %v95, %v65
    %v97 = vadd.f32 %v96, %v66
    %v98 = vadd.f32 %v97, %v67
    %v99 = vadd.f32 %v98, %v68
    %v100 = vadd.f32 %v99, %v69
    %v101 = vadd.f32 %v100, %v70
    %v102 = vadd.f32 %v101, %v71
    %v103 = vadd.f32 %v102, %v72
    %v104 = vadd.f32 %v103, %v73
    %v105 = vadd.f32 %v104, %v74
    %v106 = vadd.f32 %v105, %v75
    %v107 = vadd.f32 %v106, %v76
    %v108 = vadd.f32 %v107, %v77
    %v109 = vadd.f32 %v108, %v78
    %v110 = vadd.f32 %v109, %v79
    %v111 = vadd.f32 %v110, %v80
    %v112 = vadd.f32 %v111, %v81
    %v113 = vadd.f32 %v112, %v82
    %v114 = vadd.f32 %v113, %v83
    %v115 = vadd.f32 %v114, %v84
    %v116 = vadd.f32 %v52, %v115
    %117 = vst [vmem:[%s1] sm:$0xff] %v116
    %v118 = vld [vmem:[%s2] sm:$0xff]
    %v119 = vmul.f32 %v20, %v20
    %v120 = vmul.f32 %v21, %v21
    %v121 = vmul.f32 %v22, %v22
    %v122 = vmul.f32 %v23, %v23
    %v123 = vmul.f32 %v24, %v24
    %v124 = vmul.f32 %v25, %v25
    %v125 = vmul.f32 %v26, %v26
    %v126 = vmul.f32 %v27, %v27
    %v127 = vmul.f32 %v28, %v28
    %v128 = vmul.f32 %v29, %v29
    %v129 = vmul.f32 %v30, %v30
    %v130 = vmul.f32 %v31, %v31
    %v131 = vmul.f32 %v32, %v32
    %v132 = vmul.f32 %v33, %v33
    %v133 = vmul.f32 %v34, %v34
    %v134 = vmul.f32 %v35, %v35
    %v135 = vmul.f32 %v36, %v36
    %v136 = vmul.f32 %v37, %v37
    %v137 = vmul.f32 %v38, %v38
    %v138 = vmul.f32 %v39, %v39
    %v139 = vmul.f32 %v40, %v40
    %v140 = vmul.f32 %v41, %v41
    %v141 = vmul.f32 %v42, %v42
    %v142 = vmul.f32 %v43, %v43
    %v143 = vmul.f32 %v44, %v44
    %v144 = vmul.f32 %v45, %v45
    %v145 = vmul.f32 %v46, %v46
    %v146 = vmul.f32 %v47, %v47
    %v147 = vmul.f32 %v48, %v48
    %v148 = vmul.f32 %v49, %v49
    %v149 = vmul.f32 %v50, %v50
    %v150 = vmul.f32 %v51, %v51
    %v151 = vadd.f32 %v119, %v120
    %v152 = vadd.f32 %v151, %v121
    %v153 = vadd.f32 %v152, %v122
    %v154 = vadd.f32 %v153, %v123
    %v155 = vadd.f32 %v154, %v124
    %v156 = vadd.f32 %v155, %v125
    %v157 = vadd.f32 %v156, %v126
    %v158 = vadd.f32 %v157, %v127
    %v159 = vadd.f32 %v158, %v128
    %v160 = vadd.f32 %v159, %v129
    %v161 = vadd.f32 %v160, %v130
    %v162 = vadd.f32 %v161, %v131
    %v163 = vadd.f32 %v162, %v132
    %v164 = vadd.f32 %v163, %v133
    %v165 = vadd.f32 %v164, %v134
    %v166 = vadd.f32 %v165, %v135
    %v167 = vadd.f32 %v166, %v136
    %v168 = vadd.f32 %v167, %v137
    %v169 = vadd.f32 %v168, %v138
    %v170 = vadd.f32 %v169, %v139
    %v171 = vadd.f32 %v170, %v140
    %v172 = vadd.f32 %v171, %v141
    %v173 = vadd.f32 %v172, %v142
    %v174 = vadd.f32 %v173, %v143
    %v175 = vadd.f32 %v174, %v144
    %v176 = vadd.f32 %v175, %v145
    %v177 = vadd.f32 %v176, %v146
    %v178 = vadd.f32 %v177, %v147
    %v179 = vadd.f32 %v178, %v148
    %v180 = vadd.f32 %v179, %v149
    %v181 = vadd.f32 %v180, %v150
    %v182 = vadd.f32 %v118, %v181
    %183 = vst [vmem:[%s2] sm:$0xff] %v182
  $region13: #{_penalty_impl.1} parent=0 // pred_fallthru
    _
  // Predicated region
  $region14: #{_penalty_impl.1} parent=0 // pred_check
    %p184 = pneg %p10
  $region15: #{_penalty_impl.1} parent=0 // pred_check_branch
    %186 = sbr.rel (%p184) target = $region17
  $region16: #{_penalty_impl.1} parent=0 // pred_region
    %v187 = vlaneseq
    %v188 = vshrl.u32 %v187, 7
    %v189 = vadd.s32 %v188, 8
    %v190 = vadd.s32 %v188, 16
    %v191 = vadd.s32 %v188, 24
    %v192 = vadd.s32 %v188, 32
    %v193 = vadd.s32 %v188, 40
    %v194 = vadd.s32 %v188, 48
    %v195 = vadd.s32 %v188, 56
    %v196 = vadd.s32 %v188, 64
    %v197 = vadd.s32 %v188, 72
    %v198 = vadd.s32 %v188, 80
    %v199 = vadd.s32 %v188, 88
    %v200 = vadd.s32 %v188, 96
    %v201 = vadd.s32 %v188, 104
    %v202 = vadd.s32 %v188, 112
    %v203 = vadd.s32 %v188, 120
    %v204 = vadd.s32 %v188, 128
    %v205 = vadd.s32 %v188, 136
    %v206 = vadd.s32 %v188, 144
    %v207 = vadd.s32 %v188, 152
    %v208 = vadd.s32 %v188, 160
    %v209 = vadd.s32 %v188, 168
    %v210 = vadd.s32 %v188, 176
    %v211 = vadd.s32 %v188, 184
    %v212 = vadd.s32 %v188, 192
    %v213 = vadd.s32 %v188, 200
    %v214 = vadd.s32 %v188, 208
    %v215 = vadd.s32 %v188, 216
    %v216 = vadd.s32 %v188, 224
    %v217 = vadd.s32 %v188, 232
    %v218 = vadd.s32 %v188, 240
    %v219 = vadd.s32 %v188, 248
    %v220 = vld [vmem:[%s0] sm:$0xff]
    %v221 = vld [vmem:[%s0 + $0x8] sm:$0xff]
    %v222 = vld [vmem:[%s0 + $0x10] sm:$0xff]
    %v223 = vld [vmem:[%s0 + $0x18] sm:$0xff]
    %v224 = vld [vmem:[%s0 + $0x20] sm:$0xff]
    %v225 = vld [vmem:[%s0 + $0x28] sm:$0xff]
    %v226 = vld [vmem:[%s0 + $0x30] sm:$0xff]
    %v227 = vld [vmem:[%s0 + $0x38] sm:$0xff]
    %v228 = vld [vmem:[%s0 + $0x40] sm:$0xff]
    %v229 = vld [vmem:[%s0 + $0x48] sm:$0xff]
    %v230 = vld [vmem:[%s0 + $0x50] sm:$0xff]
    %v231 = vld [vmem:[%s0 + $0x58] sm:$0xff]
    %v232 = vld [vmem:[%s0 + $0x60] sm:$0xff]
    %v233 = vld [vmem:[%s0 + $0x68] sm:$0xff]
    %v234 = vld [vmem:[%s0 + $0x70] sm:$0xff]
    %v235 = vld [vmem:[%s0 + $0x78] sm:$0xff]
    %v236 = vld [vmem:[%s0 + $0x80] sm:$0xff]
    %v237 = vld [vmem:[%s0 + $0x88] sm:$0xff]
    %v238 = vld [vmem:[%s0 + $0x90] sm:$0xff]
    %v239 = vld [vmem:[%s0 + $0x98] sm:$0xff]
    %v240 = vld [vmem:[%s0 + $0xa0] sm:$0xff]
    %v241 = vld [vmem:[%s0 + $0xa8] sm:$0xff]
    %v242 = vld [vmem:[%s0 + $0xb0] sm:$0xff]
    %v243 = vld [vmem:[%s0 + $0xb8] sm:$0xff]
    %v244 = vld [vmem:[%s0 + $0xc0] sm:$0xff]
    %v245 = vld [vmem:[%s0 + $0xc8] sm:$0xff]
    %v246 = vld [vmem:[%s0 + $0xd0] sm:$0xff]
    %v247 = vld [vmem:[%s0 + $0xd8] sm:$0xff]
    %v248 = vld [vmem:[%s0 + $0xe0] sm:$0xff]
    %v249 = vld [vmem:[%s0 + $0xe8] sm:$0xff]
    %v250 = vld [vmem:[%s0 + $0xf0] sm:$0xff]
    %v251 = vld [vmem:[%s0 + $0xf8] sm:$0xff]
    %vm252 = vcmp.lt.s32.totalorder %v188, 16
    %vm253 = vcmp.lt.s32.totalorder %v189, 16
    %vm254 = vcmp.lt.s32.totalorder %v190, 16
    %vm255 = vcmp.lt.s32.totalorder %v191, 16
    %vm256 = vcmp.lt.s32.totalorder %v192, 16
    %vm257 = vcmp.lt.s32.totalorder %v193, 16
    %vm258 = vcmp.lt.s32.totalorder %v194, 16
    %vm259 = vcmp.lt.s32.totalorder %v195, 16
    %vm260 = vcmp.lt.s32.totalorder %v196, 16
    %vm261 = vcmp.lt.s32.totalorder %v197, 16
    %vm262 = vcmp.lt.s32.totalorder %v198, 16
    %vm263 = vcmp.lt.s32.totalorder %v199, 16
    %vm264 = vcmp.lt.s32.totalorder %v200, 16
    %vm265 = vcmp.lt.s32.totalorder %v201, 16
    %vm266 = vcmp.lt.s32.totalorder %v202, 16
    %vm267 = vcmp.lt.s32.totalorder %v203, 16
    %vm268 = vcmp.lt.s32.totalorder %v204, 16
    %vm269 = vcmp.lt.s32.totalorder %v205, 16
    %vm270 = vcmp.lt.s32.totalorder %v206, 16
    %vm271 = vcmp.lt.s32.totalorder %v207, 16
    %vm272 = vcmp.lt.s32.totalorder %v208, 16
    %vm273 = vcmp.lt.s32.totalorder %v209, 16
    %vm274 = vcmp.lt.s32.totalorder %v210, 16
    %vm275 = vcmp.lt.s32.totalorder %v211, 16
    %vm276 = vcmp.lt.s32.totalorder %v212, 16
    %vm277 = vcmp.lt.s32.totalorder %v213, 16
    %vm278 = vcmp.lt.s32.totalorder %v214, 16
    %vm279 = vcmp.lt.s32.totalorder %v215, 16
    %vm280 = vcmp.lt.s32.totalorder %v216, 16
    %vm281 = vcmp.lt.s32.totalorder %v217, 16
    %vm282 = vcmp.lt.s32.totalorder %v218, 16
    %vm283 = vcmp.lt.s32.totalorder %v219, 16
    %v284 = vsel %vm252, %v220, 0.0
    %v285 = vsel %vm253, %v221, 0.0
    %v286 = vsel %vm254, %v222, 0.0
    %v287 = vsel %vm255, %v223, 0.0
    %v288 = vsel %vm256, %v224, 0.0
    %v289 = vsel %vm257, %v225, 0.0
    %v290 = vsel %vm258, %v226, 0.0
    %v291 = vsel %vm259, %v227, 0.0
    %v292 = vsel %vm260, %v228, 0.0
    %v293 = vsel %vm261, %v229, 0.0
    %v294 = vsel %vm262, %v230, 0.0
    %v295 = vsel %vm263, %v231, 0.0
    %v296 = vsel %vm264, %v232, 0.0
    %v297 = vsel %vm265, %v233, 0.0
    %v298 = vsel %vm266, %v234, 0.0
    %v299 = vsel %vm267, %v235, 0.0
    %v300 = vsel %vm268, %v236, 0.0
    %v301 = vsel %vm269, %v237, 0.0
    %v302 = vsel %vm270, %v238, 0.0
    %v303 = vsel %vm271, %v239, 0.0
    %v304 = vsel %vm272, %v240, 0.0
    %v305 = vsel %vm273, %v241, 0.0
    %v306 = vsel %vm274, %v242, 0.0
    %v307 = vsel %vm275, %v243, 0.0
    %v308 = vsel %vm276, %v244, 0.0
    %v309 = vsel %vm277, %v245, 0.0
    %v310 = vsel %vm278, %v246, 0.0
    %v311 = vsel %vm279, %v247, 0.0
    %v312 = vsel %vm280, %v248, 0.0
    %v313 = vsel %vm281, %v249, 0.0
    %v314 = vsel %vm282, %v250, 0.0
    %v315 = vsel %vm283, %v251, 0.0
    %v316 = vld [vmem:[%s1] sm:$0xff]
    %v317 = vand.u32 2147483647, %v284
    %v318 = vand.u32 2147483647, %v285
    %v319 = vand.u32 2147483647, %v286
    %v320 = vand.u32 2147483647, %v287
    %v321 = vand.u32 2147483647, %v288
    %v322 = vand.u32 2147483647, %v289
    %v323 = vand.u32 2147483647, %v290
    %v324 = vand.u32 2147483647, %v291
    %v325 = vand.u32 2147483647, %v292
    %v326 = vand.u32 2147483647, %v293
    %v327 = vand.u32 2147483647, %v294
    %v328 = vand.u32 2147483647, %v295
    %v329 = vand.u32 2147483647, %v296
    %v330 = vand.u32 2147483647, %v297
    %v331 = vand.u32 2147483647, %v298
    %v332 = vand.u32 2147483647, %v299
    %v333 = vand.u32 2147483647, %v300
    %v334 = vand.u32 2147483647, %v301
    %v335 = vand.u32 2147483647, %v302
    %v336 = vand.u32 2147483647, %v303
    %v337 = vand.u32 2147483647, %v304
    %v338 = vand.u32 2147483647, %v305
    %v339 = vand.u32 2147483647, %v306
    %v340 = vand.u32 2147483647, %v307
    %v341 = vand.u32 2147483647, %v308
    %v342 = vand.u32 2147483647, %v309
    %v343 = vand.u32 2147483647, %v310
    %v344 = vand.u32 2147483647, %v311
    %v345 = vand.u32 2147483647, %v312
    %v346 = vand.u32 2147483647, %v313
    %v347 = vand.u32 2147483647, %v314
    %v348 = vand.u32 2147483647, %v315
    %v349 = vadd.f32 %v317, %v318
    %v350 = vadd.f32 %v349, %v319
    %v351 = vadd.f32 %v350, %v320
    %v352 = vadd.f32 %v351, %v321
    %v353 = vadd.f32 %v352, %v322
    %v354 = vadd.f32 %v353, %v323
    %v355 = vadd.f32 %v354, %v324
    %v356 = vadd.f32 %v355, %v325
    %v357 = vadd.f32 %v356, %v326
    %v358 = vadd.f32 %v357, %v327
    %v359 = vadd.f32 %v358, %v328
    %v360 = vadd.f32 %v359, %v329
    %v361 = vadd.f32 %v360, %v330
    %v362 = vadd.f32 %v361, %v331
    %v363 = vadd.f32 %v362, %v332
    %v364 = vadd.f32 %v363, %v333
    %v365 = vadd.f32 %v364, %v334
    %v366 = vadd.f32 %v365, %v335
    %v367 = vadd.f32 %v366, %v336
    %v368 = vadd.f32 %v367, %v337
    %v369 = vadd.f32 %v368, %v338
    %v370 = vadd.f32 %v369, %v339
    %v371 = vadd.f32 %v370, %v340
    %v372 = vadd.f32 %v371, %v341
    %v373 = vadd.f32 %v372, %v342
    %v374 = vadd.f32 %v373, %v343
    %v375 = vadd.f32 %v374, %v344
    %v376 = vadd.f32 %v375, %v345
    %v377 = vadd.f32 %v376, %v346
    %v378 = vadd.f32 %v377, %v347
    %v379 = vadd.f32 %v378, %v348
    %v380 = vadd.f32 %v316, %v379
    %381 = vst [vmem:[%s1] sm:$0xff] %v380
    %v382 = vld [vmem:[%s2] sm:$0xff]
    %v383 = vmul.f32 %v284, %v284
    %v384 = vmul.f32 %v285, %v285
    %v385 = vmul.f32 %v286, %v286
    %v386 = vmul.f32 %v287, %v287
    %v387 = vmul.f32 %v288, %v288
    %v388 = vmul.f32 %v289, %v289
    %v389 = vmul.f32 %v290, %v290
    %v390 = vmul.f32 %v291, %v291
    %v391 = vmul.f32 %v292, %v292
    %v392 = vmul.f32 %v293, %v293
    %v393 = vmul.f32 %v294, %v294
    %v394 = vmul.f32 %v295, %v295
    %v395 = vmul.f32 %v296, %v296
    %v396 = vmul.f32 %v297, %v297
    %v397 = vmul.f32 %v298, %v298
    %v398 = vmul.f32 %v299, %v299
    %v399 = vmul.f32 %v300, %v300
    %v400 = vmul.f32 %v301, %v301
    %v401 = vmul.f32 %v302, %v302
    %v402 = vmul.f32 %v303, %v303
    %v403 = vmul.f32 %v304, %v304
    %v404 = vmul.f32 %v305, %v305
    %v405 = vmul.f32 %v306, %v306
    %v406 = vmul.f32 %v307, %v307
    %v407 = vmul.f32 %v308, %v308
    %v408 = vmul.f32 %v309, %v309
    %v409 = vmul.f32 %v310, %v310
    %v410 = vmul.f32 %v311, %v311
    %v411 = vmul.f32 %v312, %v312
    %v412 = vmul.f32 %v313, %v313
    %v413 = vmul.f32 %v314, %v314
    %v414 = vmul.f32 %v315, %v315
    %v415 = vadd.f32 %v383, %v384
    %v416 = vadd.f32 %v415, %v385
    %v417 = vadd.f32 %v416, %v386
    %v418 = vadd.f32 %v417, %v387
    %v419 = vadd.f32 %v418, %v388
    %v420 = vadd.f32 %v419, %v389
    %v421 = vadd.f32 %v420, %v390
    %v422 = vadd.f32 %v421, %v391
    %v423 = vadd.f32 %v422, %v392
    %v424 = vadd.f32 %v423, %v393
    %v425 = vadd.f32 %v424, %v394
    %v426 = vadd.f32 %v425, %v395
    %v427 = vadd.f32 %v426, %v396
    %v428 = vadd.f32 %v427, %v397
    %v429 = vadd.f32 %v428, %v398
    %v430 = vadd.f32 %v429, %v399
    %v431 = vadd.f32 %v430, %v400
    %v432 = vadd.f32 %v431, %v401
    %v433 = vadd.f32 %v432, %v402
    %v434 = vadd.f32 %v433, %v403
    %v435 = vadd.f32 %v434, %v404
    %v436 = vadd.f32 %v435, %v405
    %v437 = vadd.f32 %v436, %v406
    %v438 = vadd.f32 %v437, %v407
    %v439 = vadd.f32 %v438, %v408
    %v440 = vadd.f32 %v439, %v409
    %v441 = vadd.f32 %v440, %v410
    %v442 = vadd.f32 %v441, %v411
    %v443 = vadd.f32 %v442, %v412
    %v444 = vadd.f32 %v443, %v413
    %v445 = vadd.f32 %v444, %v414
    %v446 = vadd.f32 %v382, %v445
    %447 = vst [vmem:[%s2] sm:$0xff] %v446
  $region17: #{_penalty_impl.1} parent=0 // pred_fallthru
    _
  // Predicated region
  $region18: #{_penalty_impl.1} parent=0 // pred_check
    _
  $region19: #{_penalty_impl.1} parent=0 // pred_check_branch
    %449 = sbr.rel (0) target = $region21
  $region20: #{_penalty_impl.1} parent=0 // pred_region
    _
  $region21: #{_penalty_impl.1} parent=0 // pred_fallthru
    _
  // Predicated region
  $region22: #{_penalty_impl.1} parent=0 // pred_check
    _
  $region23: #{_penalty_impl.1} parent=0 // pred_check_branch
    %451 = sbr.rel (0) target = $region25
  $region24: #{_penalty_impl.1} parent=0 // pred_region
    _
  $region25: #{_penalty_impl.1} parent=0 // pred_fallthru
    _
  // Predicated region
  $region26: #{_penalty_impl.1} parent=0 // pred_check
    _
  $region27: #{_penalty_impl.1} parent=0 // pred_check_branch
    %453 = sbr.rel (0) target = $region29
  $region28: #{_penalty_impl.1} parent=0 // pred_region
    _
  $region29: #{_penalty_impl.1} parent=0 // pred_fallthru
    _
  // Predicated region
  $region30: #{_penalty_impl.1} parent=0 // pred_check
    _
  $region31: #{_penalty_impl.1} parent=0 // pred_check_branch
    %455 = sbr.rel (0) target = $region33
  $region32: #{_penalty_impl.1} parent=0 // pred_region
    _
  $region33: #{_penalty_impl.1} parent=0 // pred_fallthru
    _

</llo_original>
